<compile_context>
chip_gen: v5e
topology: v5e:2x2
jax: 0.10.0
libtpu: 0.0.40
codegen_flags: <defaults>
</compile_context>

<pallas_src>
import math

import jax
import jax.numpy as jnp
from jax.experimental import pallas as pl
from jax.experimental.pallas import tpu as pltpu

# --------------------------- config (module_cfg) ---------------------------
C_S = 64             # c_s            (output node embedding size)
C_POS = 32           # c_pos_emb
C_T = 32             # c_timestep_emb
C_FM = 32            # c_fixedmask_emb
MAX_LEN = 2056
MAX_POS = 2056

B_TILE_MAX = 8       # batch elements per grid step
N_TILE_MAX = 512     # residues per grid step (multiple of 8)


# --------------------------- embedding glue (JAX) --------------------------
def get_index_embedding(indices, embed_size, max_len=MAX_LEN):
    """Sin/cos index embedding (FrameDiff get_index_embedding)."""
    k = jnp.arange(embed_size // 2, dtype=jnp.float32)
    scale = math.pi / (max_len ** (2.0 * k / embed_size))
    ang = indices[..., None].astype(jnp.float32) * scale
    return jnp.concatenate([jnp.sin(ang), jnp.cos(ang)], axis=-1)


def get_time_embedding(timesteps, embedding_dim, max_positions=MAX_POS):
    """Sin/cos timestep embedding (FrameDiff get_time_embedding), timesteps: [b]."""
    t = timesteps.astype(jnp.float32) * max_positions
    half_dim = embedding_dim // 2
    emb = math.log(max_positions) / (half_dim - 1)
    emb = jnp.exp(jnp.arange(half_dim, dtype=jnp.float32) * -emb)
    emb = t[:, None] * emb[None, :]
    return jnp.concatenate([jnp.sin(emb), jnp.cos(emb)], axis=-1)  # [b, embedding_dim]


# ------------------------------ Pallas kernel -------------------------------
def node_embed_kernel(pos_ref, mask_ref, fmask_ref, t_ref, mt_ref, lut_ref,
                      wp_ref, wt_ref, wf_ref, b_ref, o_ref):
    # Hoisted across the whole (batch-tile, N-tile) block: batch-invariant pieces.
    p = jnp.dot(pos_ref[...], wp_ref[...],
                preferred_element_type=jnp.float32)        # [Nt, C_S] pos @ Wp (shared)
    wt = wt_ref[...]                                       # [C_T, C_S]
    wf = wf_ref[...]                                       # [C_FM, C_S]
    lut = lut_ref[...]                                     # [2, C_FM] rows: emb(0), emb(1)
    row0 = lut[0:1, :]                                     # [1, C_FM]
    row1 = lut[1:2, :]                                     # [1, C_FM]
    mt = mt_ref[0]                                         # [1, C_T]  motif (t=1) time emb
    bias = b_ref[...]                                      # [1, C_S]

    b_tile = o_ref.shape[0]
    for bi in range(b_tile):                               # static unroll over batch tile
        mask = mask_ref[bi]                                # [Nt, 1]
        fm = fmask_ref[bi]                                 # [Nt, 1]  binary fixed_mask
        g = 1.0 - fm
        t = t_ref[bi]                                      # [1, C_T] per-batch time emb

        # mask is factored out post-matmul (row scaling commutes with X @ W).
        tblend = g * t + fm * mt                           # [Nt, C_T]
        fm_emb = g * row0 + fm * row1                      # [Nt, C_FM] 2-row LUT blend

        acc = p + jnp.dot(tblend, wt, preferred_element_type=jnp.float32)
        acc = mask * acc
        acc = acc + jnp.dot(fm_emb, wf, preferred_element_type=jnp.float32)
        o_ref[bi] = (acc + bias).astype(o_ref.dtype)


def node_embedder_forward(timesteps, mask, fixed_mask, params):
    """mode='motif' forward. timesteps: [b, 1], mask/fixed_mask: [b, N] (float 0/1).

    NOTE: fixed_mask must be strictly binary (0.0 / 1.0) — the in-kernel 2-row LUT
    relies on it (this matches the PyTorch module's usage).
    """
    b, num_res = mask.shape

    # Pad residues to a sublane multiple (8) so block shapes stay legal for any N.
    n_pad = ((num_res + 7) // 8) * 8
    if n_pad != num_res:
        pad = n_pad - num_res
        mask = jnp.pad(mask, ((0, 0), (0, pad)))
        fixed_mask = jnp.pad(fixed_mask, ((0, 0), (0, pad)))

    b_tile = b if b <= B_TILE_MAX else B_TILE_MAX
    n_tile = n_pad if n_pad <= N_TILE_MAX else N_TILE_MAX
    grid = (pl.cdiv(b, b_tile), pl.cdiv(n_pad, n_tile))

    # --- glue: tiny batch-invariant tables only (no [b, N, C] HBM intermediates) ---
    pos = jnp.arange(n_pad, dtype=jnp.float32)[None]                        # [1, Npad]
    pos_emb = get_index_embedding(pos, C_POS, MAX_LEN)[0]                   # [Npad, C_POS]
    t3 = get_time_embedding(timesteps[:, 0], C_T, MAX_POS)[:, None, :]      # [b, 1, C_T]
    mt3 = get_time_embedding(jnp.ones((1,), jnp.float32), C_T, MAX_POS)[:, None, :]  # [1,1,C_T]
    fm_lut = get_index_embedding(jnp.array([0.0, 1.0], jnp.float32), C_FM, MAX_LEN)  # [2, C_FM]

    mask3 = mask[..., None]                                                 # [b, Npad, 1]
    fmask3 = fixed_mask[..., None]                                          # [b, Npad, 1]
    bias2d = params["bias"][None, :]                                        # [1, C_S]

    grid_spec = pltpu.PrefetchScalarGridSpec(
        num_scalar_prefetch=0,
        grid=grid,
        in_specs=[
            pl.BlockSpec((n_tile, C_POS), lambda i, j: (j, 0)),          # pos_emb (shared)
            pl.BlockSpec((b_tile, n_tile, 1), lambda i, j: (i, j, 0)),   # mask
            pl.BlockSpec((b_tile, n_tile, 1), lambda i, j: (i, j, 0)),   # fixed_mask
            pl.BlockSpec((b_tile, 1, C_T), lambda i, j: (i, 0, 0)),      # time emb (per batch)
            pl.BlockSpec((1, 1, C_T), lambda i, j: (0, 0, 0)),           # motif time emb (shared)
            pl.BlockSpec((2, C_FM), lambda i, j: (0, 0)),                # fixed-mask LUT (shared)
            pl.BlockSpec((C_POS, C_S), lambda i, j: (0, 0)),             # W_pos
            pl.BlockSpec((C_T, C_S), lambda i, j: (0, 0)),               # W_time
            pl.BlockSpec((C_FM, C_S), lambda i, j: (0, 0)),              # W_fm
            pl.BlockSpec((1, C_S), lambda i, j: (0, 0)),                 # bias
        ],
        out_specs=pl.BlockSpec((b_tile, n_tile, C_S), lambda i, j: (i, j, 0)),
    )

    out = pl.pallas_call(
        node_embed_kernel,
        out_shape=jax.ShapeDtypeStruct((b, n_pad, C_S), jnp.float32),
        grid_spec=grid_spec,
        compiler_params=pltpu.CompilerParams(
            dimension_semantics=("parallel", "parallel")),
    )(pos_emb, mask3, fmask3, t3, mt3, fm_lut,
      params["Wp"], params["Wt"], params["Wf"], bias2d)

    return out[:, :num_res, :]


# ------------------------------ pure-JAX reference --------------------------
def node_embedder_reference(timesteps, mask, fixed_mask, params):
    b, num_res = mask.shape
    pos = jnp.arange(num_res, dtype=jnp.float32)[None]
    pos_emb = jnp.tile(get_index_embedding(pos, C_POS, MAX_LEN), (b, 1, 1))
    pos_emb = pos_emb * mask[..., None]
    te = get_time_embedding(timesteps[:, 0], C_T, MAX_POS)[:, None, :] * mask[..., None]
    mte = get_time_embedding(jnp.ones_like(timesteps)[:, 0], C_T, MAX_POS)[:, None, :] * mask[..., None]
    time_embed = te * (1.0 - fixed_mask[..., None]) + mte * fixed_mask[..., None]
    fm_emb = get_index_embedding(fixed_mask, C_FM, MAX_LEN)
    feats = jnp.concatenate([pos_emb, time_embed, fm_emb], axis=-1)
    w = jnp.concatenate([params["Wp"], params["Wt"], params["Wf"]], axis=0)  # [c_in, c_s]
    return feats @ w + params["bias"]


# ----------------------------------- main ------------------------------------
if __name__ == "__main__":
    key = jax.random.PRNGKey(0)
    kw, kb, kt, km, kf = jax.random.split(key, 5)

    b, num_res = 2, 16
    c_in = C_POS + C_T + C_FM

    # Deterministic parameter init (nn.Linear(c_in, c_s)), stored transposed.
    bound = 1.0 / math.sqrt(c_in)
    w_full = jax.random.uniform(kw, (c_in, C_S), jnp.float32, -bound, bound)
    params = {
        "Wp": w_full[:C_POS],
        "Wt": w_full[C_POS:C_POS + C_T],
        "Wf": w_full[C_POS + C_T:],
        "bias": jax.random.uniform(kb, (C_S,), jnp.float32, -bound, bound),
    }

    # Inputs: timesteps in [0,1), binary mask / fixed_mask as float32.
    timesteps = jax.random.uniform(kt, (b, 1), jnp.float32)
    mask = (jax.random.uniform(km, (b, num_res)) > 0.2).astype(jnp.float32)
    fixed_mask = (jax.random.uniform(kf, (b, num_res)) > 0.5).astype(jnp.float32)

    out = node_embedder_forward(timesteps, mask, fixed_mask, params)
    out = jax.block_until_ready(out)

    ref = node_embedder_reference(timesteps, mask, fixed_mask, params)
    assert out.shape == (b, num_res, C_S)
    assert bool(jnp.allclose(out, ref, atol=1e-5, rtol=1e-5)), "mismatch vs reference"

    print("KERNEL_OK")
</pallas_src>

<mosaic_0001>
module attributes {stable_mosaic.version = 11 : i64} {
  func.func @node_embed_kernel(%arg0: i32, %arg1: i32, %arg2: memref<16x32xf32, #tpu.memory_space<vmem>>, %arg3: memref<2x16x1xf32, #tpu.memory_space<vmem>>, %arg4: memref<2x16x1xf32, #tpu.memory_space<vmem>>, %arg5: memref<2x1x32xf32, #tpu.memory_space<vmem>>, %arg6: memref<1x1x32xf32, #tpu.memory_space<vmem>>, %arg7: memref<2x32xf32, #tpu.memory_space<vmem>>, %arg8: memref<32x64xf32, #tpu.memory_space<vmem>>, %arg9: memref<32x64xf32, #tpu.memory_space<vmem>>, %arg10: memref<32x64xf32, #tpu.memory_space<vmem>>, %arg11: memref<1x64xf32, #tpu.memory_space<vmem>>, %arg12: memref<2x16x64xf32, #tpu.memory_space<vmem>>) attributes {dimension_semantics = [#tpu.dimension_semantics<parallel>, #tpu.dimension_semantics<parallel>], iteration_bounds = array<i64: 1, 1>, scalar_prefetch = 0 : i64, scratch_operands = 0 : i64, tpu.core_type = #tpu.core_type<tc>, window_params = [{transform_indices = @transform_0, window_bounds = array<i64: 16, 32>}, {transform_indices = @transform_1, window_bounds = array<i64: 2, 16, 1>}, {transform_indices = @transform_2, window_bounds = array<i64: 2, 16, 1>}, {transform_indices = @transform_3, window_bounds = array<i64: 2, 1, 32>}, {pipeline_mode = #tpu.pipeline_mode<synchronous>, transform_indices = @transform_4, window_bounds = array<i64: 1, 1, 32>}, {pipeline_mode = #tpu.pipeline_mode<synchronous>, transform_indices = @transform_5, window_bounds = array<i64: 2, 32>}, {pipeline_mode = #tpu.pipeline_mode<synchronous>, transform_indices = @transform_6, window_bounds = array<i64: 32, 64>}, {pipeline_mode = #tpu.pipeline_mode<synchronous>, transform_indices = @transform_7, window_bounds = array<i64: 32, 64>}, {pipeline_mode = #tpu.pipeline_mode<synchronous>, transform_indices = @transform_8, window_bounds = array<i64: 32, 64>}, {pipeline_mode = #tpu.pipeline_mode<synchronous>, transform_indices = @transform_9, window_bounds = array<i64: 1, 64>}, {transform_indices = @transform_10, window_bounds = array<i64: 2, 16, 64>}]} {
    %c0 = arith.constant 0 : index
    %c0_0 = arith.constant 0 : index
    %0 = vector.load %arg2[%c0, %c0_0] : memref<16x32xf32, #tpu.memory_space<vmem>>, vector<16x32xf32>
    %c0_1 = arith.constant 0 : index
    %c0_2 = arith.constant 0 : index
    %1 = vector.load %arg8[%c0_1, %c0_2] : memref<32x64xf32, #tpu.memory_space<vmem>>, vector<32x64xf32>
    %cst = arith.constant dense<0.000000e+00> : vector<16x64xf32>
    %2 = tpu.matmul %0, %1, %cst {dimension_numbers = #tpu.dot_dimension_numbers<[1], [0], [0], [1], [0, 0, 1, 1], [], []>} : vector<16x32xf32>, vector<32x64xf32>, vector<16x64xf32> -> vector<16x64xf32>
    %c0_3 = arith.constant 0 : index
    %c0_4 = arith.constant 0 : index
    %3 = vector.load %arg9[%c0_3, %c0_4] : memref<32x64xf32, #tpu.memory_space<vmem>>, vector<32x64xf32>
    %c0_5 = arith.constant 0 : index
    %c0_6 = arith.constant 0 : index
    %4 = vector.load %arg10[%c0_5, %c0_6] : memref<32x64xf32, #tpu.memory_space<vmem>>, vector<32x64xf32>
    %c0_7 = arith.constant 0 : index
    %c0_8 = arith.constant 0 : index
    %5 = vector.load %arg7[%c0_7, %c0_8] : memref<2x32xf32, #tpu.memory_space<vmem>>, vector<2x32xf32>
    %6 = vector.extract_strided_slice %5 {offsets = [0, 0], sizes = [1, 32], strides = [1, 1]} : vector<2x32xf32> to vector<1x32xf32>
    %7 = vector.extract_strided_slice %5 {offsets = [1, 0], sizes = [1, 32], strides = [1, 1]} : vector<2x32xf32> to vector<1x32xf32>
    %c0_9 = arith.constant 0 : index
    %c0_10 = arith.constant 0 : index
    %c0_11 = arith.constant 0 : index
    %8 = vector.load %arg6[%c0_9, %c0_10, %c0_11] : memref<1x1x32xf32, #tpu.memory_space<vmem>>, vector<1x1x32xf32>
    %9 = vector.shape_cast %8 : vector<1x1x32xf32> to vector<1x32xf32>
    %c0_12 = arith.constant 0 : index
    %c0_13 = arith.constant 0 : index
    %10 = vector.load %arg11[%c0_12, %c0_13] : memref<1x64xf32, #tpu.memory_space<vmem>>, vector<1x64xf32>
    %c0_14 = arith.constant 0 : index
    %c0_15 = arith.constant 0 : index
    %c0_16 = arith.constant 0 : index
    %11 = vector.load %arg3[%c0_14, %c0_15, %c0_16] : memref<2x16x1xf32, #tpu.memory_space<vmem>>, vector<1x16x1xf32>
    %12 = vector.shape_cast %11 : vector<1x16x1xf32> to vector<16x1xf32>
    %c0_17 = arith.constant 0 : index
    %c0_18 = arith.constant 0 : index
    %c0_19 = arith.constant 0 : index
    %13 = vector.load %arg4[%c0_17, %c0_18, %c0_19] : memref<2x16x1xf32, #tpu.memory_space<vmem>>, vector<1x16x1xf32>
    %14 = vector.shape_cast %13 : vector<1x16x1xf32> to vector<16x1xf32>
    %cst_20 = arith.constant 1.000000e+00 : f32
    %15 = vector.broadcast %cst_20 : f32 to vector<16x1xf32>
    %16 = arith.subf %15, %14 : vector<16x1xf32>
    %c0_21 = arith.constant 0 : index
    %c0_22 = arith.constant 0 : index
    %c0_23 = arith.constant 0 : index
    %17 = vector.load %arg5[%c0_21, %c0_22, %c0_23] : memref<2x1x32xf32, #tpu.memory_space<vmem>>, vector<1x1x32xf32>
    %18 = vector.shape_cast %17 : vector<1x1x32xf32> to vector<1x32xf32>
    %19 = vector.broadcast %16 : vector<16x1xf32> to vector<16x32xf32>
    %20 = vector.broadcast %18 : vector<1x32xf32> to vector<16x32xf32>
    %21 = arith.mulf %19, %20 : vector<16x32xf32>
    %22 = vector.broadcast %14 : vector<16x1xf32> to vector<16x32xf32>
    %23 = vector.broadcast %9 : vector<1x32xf32> to vector<16x32xf32>
    %24 = arith.mulf %22, %23 : vector<16x32xf32>
    %25 = arith.addf %21, %24 : vector<16x32xf32>
    %26 = vector.broadcast %16 : vector<16x1xf32> to vector<16x32xf32>
    %27 = vector.broadcast %6 : vector<1x32xf32> to vector<16x32xf32>
    %28 = arith.mulf %26, %27 : vector<16x32xf32>
    %29 = vector.broadcast %14 : vector<16x1xf32> to vector<16x32xf32>
    %30 = vector.broadcast %7 : vector<1x32xf32> to vector<16x32xf32>
    %31 = arith.mulf %29, %30 : vector<16x32xf32>
    %32 = arith.addf %28, %31 : vector<16x32xf32>
    %cst_24 = arith.constant dense<0.000000e+00> : vector<16x64xf32>
    %33 = tpu.matmul %25, %3, %cst_24 {dimension_numbers = #tpu.dot_dimension_numbers<[1], [0], [0], [1], [0, 0, 1, 1], [], []>} : vector<16x32xf32>, vector<32x64xf32>, vector<16x64xf32> -> vector<16x64xf32>
    %34 = arith.addf %2, %33 : vector<16x64xf32>
    %35 = vector.broadcast %12 : vector<16x1xf32> to vector<16x64xf32>
    %36 = arith.mulf %35, %34 : vector<16x64xf32>
    %cst_25 = arith.constant dense<0.000000e+00> : vector<16x64xf32>
    %37 = tpu.matmul %32, %4, %cst_25 {dimension_numbers = #tpu.dot_dimension_numbers<[1], [0], [0], [1], [0, 0, 1, 1], [], []>} : vector<16x32xf32>, vector<32x64xf32>, vector<16x64xf32> -> vector<16x64xf32>
    %38 = arith.addf %36, %37 : vector<16x64xf32>
    %39 = vector.broadcast %10 : vector<1x64xf32> to vector<16x64xf32>
    %40 = arith.addf %38, %39 : vector<16x64xf32>
    %c0_26 = arith.constant 0 : index
    %c0_27 = arith.constant 0 : index
    %c0_28 = arith.constant 0 : index
    %41 = vector.load %arg12[%c0_26, %c0_27, %c0_28] : memref<2x16x64xf32, #tpu.memory_space<vmem>>, vector<1x16x64xf32>
    %42 = vector.shape_cast %41 : vector<1x16x64xf32> to vector<16x64xf32>
    %43 = vector.shape_cast %40 : vector<16x64xf32> to vector<1x16x64xf32>
    tpu.vector_store %arg12[%c0_26, %c0_27, %c0_28], %43 {strides = array<i32>} : memref<2x16x64xf32, #tpu.memory_space<vmem>>, vector<1x16x64xf32>,
    %c1 = arith.constant 1 : index
    %c0_29 = arith.constant 0 : index
    %c0_30 = arith.constant 0 : index
    %44 = vector.load %arg3[%c1, %c0_29, %c0_30] : memref<2x16x1xf32, #tpu.memory_space<vmem>>, vector<1x16x1xf32>
    %45 = vector.shape_cast %44 : vector<1x16x1xf32> to vector<16x1xf32>
    %c1_31 = arith.constant 1 : index
    %c0_32 = arith.constant 0 : index
    %c0_33 = arith.constant 0 : index
    %46 = vector.load %arg4[%c1_31, %c0_32, %c0_33] : memref<2x16x1xf32, #tpu.memory_space<vmem>>, vector<1x16x1xf32>
    %47 = vector.shape_cast %46 : vector<1x16x1xf32> to vector<16x1xf32>
    %cst_34 = arith.constant 1.000000e+00 : f32
    %48 = vector.broadcast %cst_34 : f32 to vector<16x1xf32>
    %49 = arith.subf %48, %47 : vector<16x1xf32>
    %c1_35 = arith.constant 1 : index
    %c0_36 = arith.constant 0 : index
    %c0_37 = arith.constant 0 : index
    %50 = vector.load %arg5[%c1_35, %c0_36, %c0_37] : memref<2x1x32xf32, #tpu.memory_space<vmem>>, vector<1x1x32xf32>
    %51 = vector.shape_cast %50 : vector<1x1x32xf32> to vector<1x32xf32>
    %52 = vector.broadcast %49 : vector<16x1xf32> to vector<16x32xf32>
    %53 = vector.broadcast %51 : vector<1x32xf32> to vector<16x32xf32>
    %54 = arith.mulf %52, %53 : vector<16x32xf32>
    %55 = vector.broadcast %47 : vector<16x1xf32> to vector<16x32xf32>
    %56 = vector.broadcast %9 : vector<1x32xf32> to vector<16x32xf32>
    %57 = arith.mulf %55, %56 : vector<16x32xf32>
    %58 = arith.addf %54, %57 : vector<16x32xf32>
    %59 = vector.broadcast %49 : vector<16x1xf32> to vector<16x32xf32>
    %60 = vector.broadcast %6 : vector<1x32xf32> to vector<16x32xf32>
    %61 = arith.mulf %59, %60 : vector<16x32xf32>
    %62 = vector.broadcast %47 : vector<16x1xf32> to vector<16x32xf32>
    %63 = vector.broadcast %7 : vector<1x32xf32> to vector<16x32xf32>
    %64 = arith.mulf %62, %63 : vector<16x32xf32>
    %65 = arith.addf %61, %64 : vector<16x32xf32>
    %cst_38 = arith.constant dense<0.000000e+00> : vector<16x64xf32>
    %66 = tpu.matmul %58, %3, %cst_38 {dimension_numbers = #tpu.dot_dimension_numbers<[1], [0], [0], [1], [0, 0, 1, 1], [], []>} : vector<16x32xf32>, vector<32x64xf32>, vector<16x64xf32> -> vector<16x64xf32>
    %67 = arith.addf %2, %66 : vector<16x64xf32>
    %68 = vector.broadcast %45 : vector<16x1xf32> to vector<16x64xf32>
    %69 = arith.mulf %68, %67 : vector<16x64xf32>
    %cst_39 = arith.constant dense<0.000000e+00> : vector<16x64xf32>
    %70 = tpu.matmul %65, %4, %cst_39 {dimension_numbers = #tpu.dot_dimension_numbers<[1], [0], [0], [1], [0, 0, 1, 1], [], []>} : vector<16x32xf32>, vector<32x64xf32>, vector<16x64xf32> -> vector<16x64xf32>
    %71 = arith.addf %69, %70 : vector<16x64xf32>
    %72 = vector.broadcast %10 : vector<1x64xf32> to vector<16x64xf32>
    %73 = arith.addf %71, %72 : vector<16x64xf32>
    %c1_40 = arith.constant 1 : index
    %c0_41 = arith.constant 0 : index
    %c0_42 = arith.constant 0 : index
    %74 = vector.load %arg12[%c1_40, %c0_41, %c0_42] : memref<2x16x64xf32, #tpu.memory_space<vmem>>, vector<1x16x64xf32>
    %75 = vector.shape_cast %74 : vector<1x16x64xf32> to vector<16x64xf32>
    %76 = vector.shape_cast %73 : vector<16x64xf32> to vector<1x16x64xf32>
    tpu.vector_store %arg12[%c1_40, %c0_41, %c0_42], %76 {strides = array<i32>} : memref<2x16x64xf32, #tpu.memory_space<vmem>>, vector<1x16x64xf32>,
    return
  }
  func.func @transform_0(%arg0: i32, %arg1: i32) -> (i32, i32) {
    %c0_i32 = arith.constant 0 : i32
    %c0_i32_0 = arith.constant 0 : i32
    return %arg1, %c0_i32 : i32, i32
  }
  func.func @transform_1(%arg0: i32, %arg1: i32) -> (i32, i32, i32) {
    %c0_i32 = arith.constant 0 : i32
    %c0_i32_0 = arith.constant 0 : i32
    return %arg0, %arg1, %c0_i32 : i32, i32, i32
  }
  func.func @transform_2(%arg0: i32, %arg1: i32) -> (i32, i32, i32) {
    %c0_i32 = arith.constant 0 : i32
    %c0_i32_0 = arith.constant 0 : i32
    return %arg0, %arg1, %c0_i32 : i32, i32, i32
  }
  func.func @transform_3(%arg0: i32, %arg1: i32) -> (i32, i32, i32) {
    %c0_i32 = arith.constant 0 : i32
    %c0_i32_0 = arith.constant 0 : i32
    %c0_i32_1 = arith.constant 0 : i32
    return %arg0, %c0_i32, %c0_i32_0 : i32, i32, i32
  }
  func.func @transform_4(%arg0: i32, %arg1: i32) -> (i32, i32, i32) {
    %c0_i32 = arith.constant 0 : i32
    %c0_i32_0 = arith.constant 0 : i32
    %c0_i32_1 = arith.constant 0 : i32
    %c0_i32_2 = arith.constant 0 : i32
    return %c0_i32, %c0_i32_0, %c0_i32_1 : i32, i32, i32
  }
  func.func @transform_5(%arg0: i32, %arg1: i32) -> (i32, i32) {
    %c0_i32 = arith.constant 0 : i32
    %c0_i32_0 = arith.constant 0 : i32
    %c0_i32_1 = arith.constant 0 : i32
    return %c0_i32, %c0_i32_0 : i32, i32
  }
  func.func @transform_6(%arg0: i32, %arg1: i32) -> (i32, i32) {
    %c0_i32 = arith.constant 0 : i32
    %c0_i32_0 = arith.constant 0 : i32
    %c0_i32_1 = arith.constant 0 : i32
    return %c0_i32, %c0_i32_0 : i32, i32
  }
  func.func @transform_7(%arg0: i32, %arg1: i32) -> (i32, i32) {
    %c0_i32 = arith.constant 0 : i32
    %c0_i32_0 = arith.constant 0 : i32
    %c0_i32_1 = arith.constant 0 : i32
    return %c0_i32, %c0_i32_0 : i32, i32
  }
  func.func @transform_8(%arg0: i32, %arg1: i32) -> (i32, i32) {
    %c0_i32 = arith.constant 0 : i32
    %c0_i32_0 = arith.constant 0 : i32
    %c0_i32_1 = arith.constant 0 : i32
    return %c0_i32, %c0_i32_0 : i32, i32
  }
  func.func @transform_9(%arg0: i32, %arg1: i32) -> (i32, i32) {
    %c0_i32 = arith.constant 0 : i32
    %c0_i32_0 = arith.constant 0 : i32
    %c0_i32_1 = arith.constant 0 : i32
    return %c0_i32, %c0_i32_0 : i32, i32
  }
  func.func @transform_10(%arg0: i32, %arg1: i32) -> (i32, i32, i32) {
    %c0_i32 = arith.constant 0 : i32
    %c0_i32_0 = arith.constant 0 : i32
    return %arg0, %arg1, %c0_i32 : i32, i32, i32
  }
}

</mosaic_0001>

<llo_original>
// kernel: tpu_custom_call.1
$region0: #{tpu_custom_call.1}
  #allocation0 [shape = 'u32[]', space=smem, size = 0x4, offset = 0x4, fixed_abs, tag = 'smem constant byte address 0x4 - core index']
  #allocation1 [shape = 'u32[72,128]{1,0:T(1,128)}', space=vmem, size = 0x9000, scoped, tag = 'internal scratch']
  %s0 = inlined_call_operand.hbm [shape: f32[16,32], index: 0, kind: input, shape index: {}]
  %s1 = inlined_call_operand.vmem [shape: f32[2,16,1], index: 1, kind: input, shape index: {}]
  %s2 = inlined_call_operand.vmem [shape: f32[2,16,1], index: 2, kind: input, shape index: {}]
  %s3 = inlined_call_operand.vmem [shape: f32[2,1,32], index: 3, kind: input, shape index: {}]
  %s4 = inlined_call_operand.vmem [shape: f32[1,1,32], index: 4, kind: input, shape index: {}]
  %s5 = inlined_call_operand.vmem [shape: f32[2,32], index: 5, kind: input, shape index: {}]
  %s6 = inlined_call_operand.vmem [shape: f32[32,64], index: 6, kind: input, shape index: {}]
  %s7 = inlined_call_operand.vmem [shape: f32[32,64], index: 7, kind: input, shape index: {}]
  %s8 = inlined_call_operand.hbm [shape: f32[32,64], index: 8, kind: input, shape index: {}]
  %s9 = inlined_call_operand.vmem [shape: f32[1,64], index: 9, kind: input, shape index: {}]
  %s10 = inlined_call_operand.hbm [shape: f32[2,16,64], index: 10, kind: output, shape index: {}]
  %s11 = sld [smem:[#allocation0]]
  $region58: #{tpu_custom_call.1} parent=0
    _
  %s13 = ssub.s32 1, %s11
  %s14 = scalar_select 0, %s13, %s11
  $region1: #{tpu_custom_call.1} parent=0
    #allocation2 [shape = 'u8[8192]{0}', space=vmem, size = 0x2000, scoped, tag = 'input window, operand 0, single buffered']
    #allocation3 [shape = 's32[1]{0}', space=sflag, size = 0x4, scoped, tag = 'scoped memory for tpu_custom_call.1']
    #allocation4 [shape = 's32[1]{0}', space=sflag, size = 0x4, scoped, tag = 'scoped memory for tpu_custom_call.1']
    #allocation5 [shape = 'u8[16384]{0}', space=vmem, size = 0x4000, scoped, tag = 'input window, operand 8, single buffered']
    #allocation6 [shape = 's32[1]{0}', space=sflag, size = 0x4, scoped, tag = 'scoped memory for tpu_custom_call.1']
    #allocation7 [shape = 'u8[16384]{0}', space=vmem, size = 0x4000, scoped, tag = 'output window, operand 0, single buffered']
    %15 = vsyncpa [#allocation3], 0
    %16 = vsyncpa [#allocation6], 0
    %17 = vsyncpa [#allocation4], 0
    // Predicated region
    $region2: #{tpu_custom_call.1} parent=1 // pred_check
      _
    $region3: #{tpu_custom_call.1} parent=1 // pred_check_branch
      %19 = sbr.rel (0) target = $region5
    $region4: #{tpu_custom_call.1} parent=1 // pred_region
      %21 = vsyncadd [#allocation3], 0
      %s22 = sshll.u32 %s0, 4
      %s23 = int_to_ptr.hbm [resolvable:$true] %s22
      %s24 = sshll.u32 [#allocation2], 4
      %s25 = int_to_ptr.vmem [resolvable:$true] %s24
      %30 = dma.hbm_to_vmem [thread:$0]  %s23, 256, %s25, [#allocation3], 128, 128, 8
    $region5: #{tpu_custom_call.1} parent=1 // pred_fallthru
      _
    // Predicated region
    $region6: #{tpu_custom_call.1} parent=1 // pred_check
      _
    $region7: #{tpu_custom_call.1} parent=1 // pred_check_branch
      %32 = sbr.rel (0) target = $region9
    $region8: #{tpu_custom_call.1} parent=1 // pred_region
      _
    $region9: #{tpu_custom_call.1} parent=1 // pred_fallthru
      _
    // Predicated region
    $region10: #{tpu_custom_call.1} parent=1 // pred_check
      _
    $region11: #{tpu_custom_call.1} parent=1 // pred_check_branch
      %34 = sbr.rel (0) target = $region13
    $region12: #{tpu_custom_call.1} parent=1 // pred_region
      _
    $region13: #{tpu_custom_call.1} parent=1 // pred_fallthru
      _
    // Predicated region
    $region14: #{tpu_custom_call.1} parent=1 // pred_check
      _
    $region15: #{tpu_custom_call.1} parent=1 // pred_check_branch
      %36 = sbr.rel (0) target = $region17
    $region16: #{tpu_custom_call.1} parent=1 // pred_region
      _
    $region17: #{tpu_custom_call.1} parent=1 // pred_fallthru
      _
    // Predicated region
    $region18: #{tpu_custom_call.1} parent=1 // pred_check
      _
    $region19: #{tpu_custom_call.1} parent=1 // pred_check_branch
      %38 = sbr.rel (0) target = $region21
    $region20: #{tpu_custom_call.1} parent=1 // pred_region
      _
    $region21: #{tpu_custom_call.1} parent=1 // pred_fallthru
      _
    // Predicated region
    $region22: #{tpu_custom_call.1} parent=1 // pred_check
      _
    $region23: #{tpu_custom_call.1} parent=1 // pred_check_branch
      %40 = sbr.rel (0) target = $region25
    $region24: #{tpu_custom_call.1} parent=1 // pred_region
      _
    $region25: #{tpu_custom_call.1} parent=1 // pred_fallthru
      _
    // Predicated region
    $region26: #{tpu_custom_call.1} parent=1 // pred_check
      _
    $region27: #{tpu_custom_call.1} parent=1 // pred_check_branch
      %42 = sbr.rel (0) target = $region29
    $region28: #{tpu_custom_call.1} parent=1 // pred_region
      _
    $region29: #{tpu_custom_call.1} parent=1 // pred_fallthru
      _
    // Predicated region
    $region30: #{tpu_custom_call.1} parent=1 // pred_check
      _
    $region31: #{tpu_custom_call.1} parent=1 // pred_check_branch
      %44 = sbr.rel (0) target = $region33
    $region32: #{tpu_custom_call.1} parent=1 // pred_region
      _
    $region33: #{tpu_custom_call.1} parent=1 // pred_fallthru
      _
    // Predicated region
    $region34: #{tpu_custom_call.1} parent=1 // pred_check
      _
    $region35: #{tpu_custom_call.1} parent=1 // pred_check_branch
      %46 = sbr.rel (0) target = $region37
    $region36: #{tpu_custom_call.1} parent=1 // pred_region
      %48 = vsyncadd [#allocation6], 0
      %s49 = sshll.u32 %s8, 4
      %s50 = int_to_ptr.hbm [resolvable:$true] %s49
      %s51 = sshll.u32 [#allocation5], 4
      %s52 = int_to_ptr.vmem [resolvable:$true] %s51
      %57 = dma.hbm_to_vmem [thread:$0]  %s50, 512, %s52, [#allocation6], 128, 128, 8
    $region37: #{tpu_custom_call.1} parent=1 // pred_fallthru
      _
    // Predicated region
    $region38: #{tpu_custom_call.1} parent=1 // pred_check
      _
    $region39: #{tpu_custom_call.1} parent=1 // pred_check_branch
      %59 = sbr.rel (0) target = $region41
    $region40: #{tpu_custom_call.1} parent=1 // pred_region
      _
    $region41: #{tpu_custom_call.1} parent=1 // pred_fallthru
      _
    // Predicated region
    $region42: #{tpu_custom_call.1} parent=1 // pred_check
      _
    $region43: #{tpu_custom_call.1} parent=1 // pred_check_branch
      %61 = sbr.rel (0) target = $region45
    $region44: #{tpu_custom_call.1} parent=1 // pred_region
      %63 = dma.done [#allocation3], 256
    $region45: #{tpu_custom_call.1} parent=1 // pred_fallthru
      _
    // Predicated region
    $region46: #{tpu_custom_call.1} parent=1 // pred_check
      _
    $region47: #{tpu_custom_call.1} parent=1 // pred_check_branch
      %65 = sbr.rel (0) target = $region49
    $region48: #{tpu_custom_call.1} parent=1 // pred_region
      %67 = dma.done [#allocation6], 512
    $region49: #{tpu_custom_call.1} parent=1 // pred_fallthru
      _
    %v68 = vld [vmem:[#allocation2] sm:$0xff]
    %v69 = vld [vmem:[#allocation2 + $0x8] sm:$0xff]
    %v70 = vld [vmem:[%s6] sm:$0xff]
    %v71 = vld [vmem:[%s6 + $0x8] sm:$0xff]
    %v72 = vld [vmem:[%s6 + $0x10] sm:$0xff]
    %v73 = vld [vmem:[%s6 + $0x18] sm:$0xff]
    %vm74 = vcmask 261120
    %v76 = vsel %vm74, %v68, 0
    %v79 = vsel %vm74, %v69, 0
    %81 = vmatpush.msra.mxu0 0.0
    %82 = vmatpush.msra.mxu0 0.0
    %83 = vmatpush.msra.mxu0 0.0
    %84 = vmatpush.msra.mxu0 0.0
    %85 = vmatpush.msra.mxu0 0.0
    %86 = vmatpush.msra.mxu0 0.0
    %87 = vmatpush.msra.mxu0 0.0
    %88 = vmatpush.msra.mxu0 0.0
    %89 = vmatpush.msra.mxu0 0.0
    %90 = vmatpush.msra.mxu0 0.0
    %91 = vmatpush.msra.mxu0 0.0
    %92 = vmatpush.msra.mxu0 0.0
    %93 = vmatpush.msra.mxu0 %v73
    %94 = vmatpush.msra.mxu0 %v72
    %95 = vmatpush.msra.mxu0 %v71
    %96 = vmatpush.msra.mxu0 %v70
    %97 = vmatmul.f32.gmra.mxu0 %v76
    %v98 = vpop.f32.mrf.mxu0
    %v99 = vadd.f32 0.0, %v98
    %100 = vmatmul.f32.gmra.mxu0 %v79
    %v101 = vpop.f32.mrf.mxu0
    %v102 = vadd.f32 0.0, %v101
    %103 = vdwg.mxu0
    %v104 = vld [vmem:[%s7] sm:$0xff]
    %v105 = vld [vmem:[%s7 + $0x8] sm:$0xff]
    %v106 = vld [vmem:[%s7 + $0x10] sm:$0xff]
    %v107 = vld [vmem:[%s7 + $0x18] sm:$0xff]
    %v108 = vld [vmem:[#allocation5] sm:$0xff]
    %v109 = vld [vmem:[#allocation5 + $0x8] sm:$0xff]
    %v110 = vld [vmem:[#allocation5 + $0x10] sm:$0xff]
    %v111 = vld [vmem:[#allocation5 + $0x18] sm:$0xff]
    %v112 = vld [vmem:[%s5] sm:$0x3]
    %v113 = vld [vmem:[%s4] sm:$0x1]
    %v114 = vld [vmem:[%s9] sm:$0x1]
    %v115 = vld [vmem:[%s1] sm:$0xff]
    %v116 = vld [vmem:[%s1 + $0x8] sm:$0xff]
    %v117 = vld [vmem:[%s2] sm:$0xff]
    %v118 = vld [vmem:[%s2 + $0x8] sm:$0xff]
    %v119 = vsub.f32 1.0, %v117
    %v120 = vsub.f32 1.0, %v118
    %v121 = vld [vmem:[%s3] sm:$0x1]
    %123 = vset.pattern.permute.xlu0 0
    %124 = vperm.xlu0 %123, %v119
    %v125 = vpop.permute.xlu0 %124
    %128 = vset.pattern.permute.xlu0 0
    %129 = vperm.xlu0 %128, %v120
    %v130 = vpop.permute.xlu0 %129
    %v133 = vperm.slane %v121, 0
    %v135 = vmul.f32 %v125, %v133
    %v136 = vmul.f32 %v130, %v133
    %138 = vset.pattern.permute.xlu0 0
    %139 = vperm.xlu0 %138, %v117
    %v140 = vpop.permute.xlu0 %139
    %143 = vset.pattern.permute.xlu0 0
    %144 = vperm.xlu0 %143, %v118
    %v145 = vpop.permute.xlu0 %144
    %v148 = vperm.slane %v113, 0
    %v150 = vmul.f32 %v140, %v148
    %v151 = vmul.f32 %v145, %v148
    %v152 = vadd.f32 %v135, %v150
    %v153 = vadd.f32 %v136, %v151
    %v154 = vperm.slane %v112, 0
    %v155 = vmul.f32 %v125, %v154
    %v156 = vmul.f32 %v130, %v154
    %v157 = vperm.slane %v112, 1
    %v158 = vmul.f32 %v140, %v157
    %v159 = vmul.f32 %v145, %v157
    %v160 = vadd.f32 %v155, %v158
    %v161 = vadd.f32 %v156, %v159
    %v163 = vsel %vm74, %v152, 0
    %v166 = vsel %vm74, %v153, 0
    %168 = vmatpush.msra.mxu0 0.0
    %169 = vmatpush.msra.mxu0 0.0
    %170 = vmatpush.msra.mxu0 0.0
    %171 = vmatpush.msra.mxu0 0.0
    %172 = vmatpush.msra.mxu0 0.0
    %173 = vmatpush.msra.mxu0 0.0
    %174 = vmatpush.msra.mxu0 0.0
    %175 = vmatpush.msra.mxu0 0.0
    %176 = vmatpush.msra.mxu0 0.0
    %177 = vmatpush.msra.mxu0 0.0
    %178 = vmatpush.msra.mxu0 0.0
    %179 = vmatpush.msra.mxu0 0.0
    %180 = vmatpush.msra.mxu0 %v107
    %181 = vmatpush.msra.mxu0 %v106
    %182 = vmatpush.msra.mxu0 %v105
    %183 = vmatpush.msra.mxu0 %v104
    %184 = vmatmul.f32.gmra.mxu0 %v163
    %v185 = vpop.f32.mrf.mxu0
    %v186 = vadd.f32 0.0, %v185
    %187 = vmatmul.f32.gmra.mxu0 %v166
    %v188 = vpop.f32.mrf.mxu0
    %v189 = vadd.f32 0.0, %v188
    %190 = vdwg.mxu0
    %v191 = vadd.f32 %v99, %v186
    %v192 = vadd.f32 %v102, %v189
    %194 = vset.pattern.permute.xlu0 0
    %195 = vperm.xlu0 %194, %v115
    %v196 = vpop.permute.xlu0 %195
    %199 = vset.pattern.permute.xlu0 0
    %200 = vperm.xlu0 %199, %v116
    %v201 = vpop.permute.xlu0 %200
    %v203 = vmul.f32 %v196, %v191
    %v204 = vmul.f32 %v201, %v192
    %v206 = vsel %vm74, %v160, 0
    %v209 = vsel %vm74, %v161, 0
    %211 = vmatpush.msra.mxu0 0.0
    %212 = vmatpush.msra.mxu0 0.0
    %213 = vmatpush.msra.mxu0 0.0
    %214 = vmatpush.msra.mxu0 0.0
    %215 = vmatpush.msra.mxu0 0.0
    %216 = vmatpush.msra.mxu0 0.0
    %217 = vmatpush.msra.mxu0 0.0
    %218 = vmatpush.msra.mxu0 0.0
    %219 = vmatpush.msra.mxu0 0.0
    %220 = vmatpush.msra.mxu0 0.0
    %221 = vmatpush.msra.mxu0 0.0
    %222 = vmatpush.msra.mxu0 0.0
    %223 = vmatpush.msra.mxu0 %v111
    %224 = vmatpush.msra.mxu0 %v110
    %225 = vmatpush.msra.mxu0 %v109
    %226 = vmatpush.msra.mxu0 %v108
    %227 = vmatmul.f32.gmra.mxu0 %v206
    %v228 = vpop.f32.mrf.mxu0
    %v229 = vadd.f32 0.0, %v228
    %230 = vmatmul.f32.gmra.mxu0 %v209
    %v231 = vpop.f32.mrf.mxu0
    %v232 = vadd.f32 0.0, %v231
    %233 = vdwg.mxu0
    %v234 = vadd.f32 %v203, %v229
    %v235 = vadd.f32 %v204, %v232
    %v237 = vperm.slane %v114, 0
    %v239 = vadd.f32 %v234, %v237
    %v240 = vadd.f32 %v235, %v237
    %vm241 = vcmask 523264
    %242 = vst.msk [vmem:[#allocation7] sm:$0xff] %vm241, %v239
    %243 = vst.msk [vmem:[#allocation7 + $0x8] sm:$0xff] %vm241, %v240
    %s244 = scalar_lea.vmem %s1, 16
    %v245 = vld [vmem:[%s244] sm:$0xff]
    %v246 = vld [vmem:[%s244 + $0x8] sm:$0xff]
    %s247 = scalar_lea.vmem %s2, 16
    %v248 = vld [vmem:[%s247] sm:$0xff]
    %v249 = vld [vmem:[%s247 + $0x8] sm:$0xff]
    %v250 = vsub.f32 1.0, %v248
    %v251 = vsub.f32 1.0, %v249
    %s252 = scalar_lea.vmem %s3, 1
    %v253 = vld [vmem:[%s252] sm:$0x1]
    %255 = vset.pattern.permute.xlu0 0
    %256 = vperm.xlu0 %255, %v250
    %v257 = vpop.permute.xlu0 %256
    %260 = vset.pattern.permute.xlu0 0
    %261 = vperm.xlu0 %260, %v251
    %v262 = vpop.permute.xlu0 %261
    %v265 = vperm.slane %v253, 0
    %v267 = vmul.f32 %v257, %v265
    %v268 = vmul.f32 %v262, %v265
    %270 = vset.pattern.permute.xlu0 0
    %271 = vperm.xlu0 %270, %v248
    %v272 = vpop.permute.xlu0 %271
    %275 = vset.pattern.permute.xlu0 0
    %276 = vperm.xlu0 %275, %v249
    %v277 = vpop.permute.xlu0 %276
    %v279 = vmul.f32 %v272, %v148
    %v280 = vmul.f32 %v277, %v148
    %v281 = vadd.f32 %v267, %v279
    %v282 = vadd.f32 %v268, %v280
    %v283 = vmul.f32 %v257, %v154
    %v284 = vmul.f32 %v262, %v154
    %v285 = vmul.f32 %v272, %v157
    %v286 = vmul.f32 %v277, %v157
    %v287 = vadd.f32 %v283, %v285
    %v288 = vadd.f32 %v284, %v286
    %v290 = vsel %vm74, %v281, 0
    %v293 = vsel %vm74, %v282, 0
    %295 = vmatpush.msra.mxu0 0.0
    %296 = vmatpush.msra.mxu0 0.0
    %297 = vmatpush.msra.mxu0 0.0
    %298 = vmatpush.msra.mxu0 0.0
    %299 = vmatpush.msra.mxu0 0.0
    %300 = vmatpush.msra.mxu0 0.0
    %301 = vmatpush.msra.mxu0 0.0
    %302 = vmatpush.msra.mxu0 0.0
    %303 = vmatpush.msra.mxu0 0.0
    %304 = vmatpush.msra.mxu0 0.0
    %305 = vmatpush.msra.mxu0 0.0
    %306 = vmatpush.msra.mxu0 0.0
    %307 = vmatpush.msra.mxu0 %v107
    %308 = vmatpush.msra.mxu0 %v106
    %309 = vmatpush.msra.mxu0 %v105
    %310 = vmatpush.msra.mxu0 %v104
    %311 = vmatmul.f32.gmra.mxu0 %v290
    %v312 = vpop.f32.mrf.mxu0
    %v313 = vadd.f32 0.0, %v312
    %314 = vmatmul.f32.gmra.mxu0 %v293
    %v315 = vpop.f32.mrf.mxu0
    %v316 = vadd.f32 0.0, %v315
    %317 = vdwg.mxu0
    %v318 = vadd.f32 %v99, %v313
    %v319 = vadd.f32 %v102, %v316
    %321 = vset.pattern.permute.xlu0 0
    %322 = vperm.xlu0 %321, %v245
    %v323 = vpop.permute.xlu0 %322
    %326 = vset.pattern.permute.xlu0 0
    %327 = vperm.xlu0 %326, %v246
    %v328 = vpop.permute.xlu0 %327
    %v330 = vmul.f32 %v323, %v318
    %v331 = vmul.f32 %v328, %v319
    %v333 = vsel %vm74, %v287, 0
    %v336 = vsel %vm74, %v288, 0
    %338 = vmatpush.msra.mxu0 0.0
    %339 = vmatpush.msra.mxu0 0.0
    %340 = vmatpush.msra.mxu0 0.0
    %341 = vmatpush.msra.mxu0 0.0
    %342 = vmatpush.msra.mxu0 0.0
    %343 = vmatpush.msra.mxu0 0.0
    %344 = vmatpush.msra.mxu0 0.0
    %345 = vmatpush.msra.mxu0 0.0
    %346 = vmatpush.msra.mxu0 0.0
    %347 = vmatpush.msra.mxu0 0.0
    %348 = vmatpush.msra.mxu0 0.0
    %349 = vmatpush.msra.mxu0 0.0
    %350 = vmatpush.msra.mxu0 %v111
    %351 = vmatpush.msra.mxu0 %v110
    %352 = vmatpush.msra.mxu0 %v109
    %353 = vmatpush.msra.mxu0 %v108
    %354 = vmatmul.f32.gmra.mxu0 %v333
    %v355 = vpop.f32.mrf.mxu0
    %v356 = vadd.f32 0.0, %v355
    %357 = vmatmul.f32.gmra.mxu0 %v336
    %v358 = vpop.f32.mrf.mxu0
    %v359 = vadd.f32 0.0, %v358
    %360 = vdwg.mxu0
    %v361 = vadd.f32 %v330, %v356
    %v362 = vadd.f32 %v331, %v359
    %v363 = vadd.f32 %v361, %v237
    %v364 = vadd.f32 %v362, %v237
    %s365 = scalar_lea.vmem [#allocation7], 16
    %366 = vst.msk [vmem:[%s365] sm:$0xff] %vm241, %v363
    %367 = vst.msk [vmem:[%s365 + $0x8] sm:$0xff] %vm241, %v364
    // Predicated region
    $region50: #{tpu_custom_call.1} parent=1 // pred_check
      _
    $region51: #{tpu_custom_call.1} parent=1 // pred_check_branch
      %369 = sbr.rel (0) target = $region53
    $region52: #{tpu_custom_call.1} parent=1 // pred_region
      %371 = vsyncadd [#allocation4], 0
      %s372 = sshll.u32 [#allocation7], 4
      %s373 = int_to_ptr.vmem [resolvable:$true] %s372
      %s374 = sshll.u32 %s10, 4
      %s375 = int_to_ptr.hbm [resolvable:$true] %s374
      %380 = dma.vmem_to_hbm [thread:$0]  %s373, 512, %s375, [#allocation4], 128, 128, 8
    $region53: #{tpu_custom_call.1} parent=1 // pred_fallthru
      _
    // Predicated region
    $region54: #{tpu_custom_call.1} parent=1 // pred_check
      _
    $region55: #{tpu_custom_call.1} parent=1 // pred_check_branch
      %382 = sbr.rel (0) target = $region57
    $region56: #{tpu_custom_call.1} parent=1 // pred_region
      %384 = dma.done [#allocation4], 512
    $region57: #{tpu_custom_call.1} parent=1 // pred_fallthru
      _
    %385 = vsyncpa [#allocation3], 1
    %386 = vsyncpa [#allocation6], 1
    %387 = vsyncpa [#allocation4], 1

</llo_original>
